<compile_context>
chip_gen: v7x
topology: tpu7x:2x2x1
jax: 0.10.0
libtpu: 0.0.40
codegen_flags: <defaults>
</compile_context>

<pallas_src>
import jax
import jax.numpy as jnp
from jax.experimental import pallas as pl
from jax.experimental.pallas import tpu as pltpu

NUM_CLASSES = 8
SMOOTH = 1.0

# ~2 MiB of f32 per input per grid step (= 64K lane-equivalents at C=8).
# Double-buffered inputs (2 arrays x 2 buffers x 2 MiB = 8 MiB) plus the f32
# elementwise temporaries stay well under the 32 MiB scoped-VMEM limit
# requested below, which is safe on every generation.
_TARGET_BLOCK_ELEMS = NUM_CLASSES * 65536
_VMEM_LIMIT_BYTES = 32 * 1024 * 1024


def _cdiv(a: int, b: int) -> int:
    return -(-a // b)


def _round_up(x: int, m: int) -> int:
    return _cdiv(x, m) * m


def _largest_divisor_leq(n: int, cap: int) -> int:
    for d in range(min(n, cap), 0, -1):
        if n % d == 0:
            return d
    return 1


def _plan_tiling(n: int, c: int, hw: int):
    """Choose (nb, t_lane, n_mblk, hw_pad) so each grid step moves ~2 MiB/input."""
    lane_target = max(128, _TARGET_BLOCK_ELEMS // c)
    hw128 = _round_up(hw, 128)
    if hw128 <= lane_target:
        n_mblk, t_lane = 1, hw128
    else:
        n_mblk = _cdiv(hw128, lane_target)
        # Bounds total padding by roughly n_mblk * 128 columns.
        t_lane = _round_up(_cdiv(hw128, n_mblk), 128)
    hw_pad = n_mblk * t_lane
    # Fold several batch items into one block when H*W alone is too small to
    # amortize the fixed per-step pipeline overhead.
    nb = _largest_divisor_leq(n, max(1, _TARGET_BLOCK_ELEMS // (c * t_lane)))
    return nb, t_lane, n_mblk, hw_pad


def _make_partial_kernel(hw_valid: int, t_lane: int, needs_mask: bool):
    """Per-tile kernel: channel softmax + per-class partial sums."""

    def kernel(out_ref, tgt_ref, part_ref):
        x = out_ref[...].astype(jnp.float32)     # (nb, C, T) logits
        t = tgt_ref[...].astype(jnp.float32)     # (nb, C, T) == target.float()

        # Softmax2d == softmax over the channel (sublane) axis.
        m = jnp.max(x, axis=1, keepdims=True)                                  # (nb, 1, T)
        e = jnp.exp(x - m)                                                     # EUP
        s_inv = pl.reciprocal(jnp.sum(e, axis=1, keepdims=True), approx=True)  # EUP
        p = e * s_inv                                                          # VPU

        if needs_mask:
            # Padded columns carry softmax mass 1/C per class; zero them so
            # they do not leak into psum (targets are already zero-padded).
            col = (jax.lax.broadcasted_iota(jnp.int32, (1, 1, t_lane), 2)
                   + pl.program_id(1) * t_lane)
            p = jnp.where(col < hw_valid, p, 0.0)

        # Per-class partial reductions over this tile only (lanes first, then
        # the folded batch items).  The non-linear dice formula is applied
        # exactly once, on the fully accumulated sums, in the wrapper epilogue.
        part_ref[0, 0, 0] = jnp.sum(jnp.sum(p * t, axis=2, keepdims=True), axis=0)  # (C, 1)
        part_ref[0, 0, 1] = jnp.sum(jnp.sum(p, axis=2, keepdims=True), axis=0)      # (C, 1)
        part_ref[0, 0, 2] = jnp.sum(jnp.sum(t, axis=2, keepdims=True), axis=0)      # (C, 1)

    return kernel


def dice_loss(output_nchw: jax.Array, target_nchw: jax.Array,
              class_weights=None) -> jax.Array:
    """output_nchw: (N, C, H, W) logits; target_nchw: (N, C, H, W) targets."""
    n, c, h, w = output_nchw.shape
    assert c == NUM_CLASSES, "module loops over exactly 8 classes"
    assert target_nchw.shape == output_nchw.shape
    hw = h * w

    nb, t_lane, n_mblk, hw_pad = _plan_tiling(n, c, hw)
    n_bblk = n // nb
    needs_mask = hw_pad != hw

    # Free, contiguous reshape (no HBM round trip, unlike a transpose).
    out_ncm = output_nchw.reshape(n, c, hw)
    tgt_ncm = target_nchw.reshape(n, c, hw)
    if needs_mask:
        pad = hw_pad - hw
        out_ncm = jnp.pad(out_ncm, ((0, 0), (0, 0), (0, pad)))
        tgt_ncm = jnp.pad(tgt_ncm, ((0, 0), (0, 0), (0, pad)))

    in_spec = pl.BlockSpec((nb, c, t_lane), lambda i, j: (i, 0, j))
    part_spec = pl.BlockSpec((1, 1, 3, c, 1), lambda i, j: (i, j, 0, 0, 0))

    parts = pl.pallas_call(
        _make_partial_kernel(hw, t_lane, needs_mask),
        out_shape=jax.ShapeDtypeStruct((n_bblk, n_mblk, 3, c, 1), jnp.float32),
        grid_spec=pltpu.PrefetchScalarGridSpec(
            num_scalar_prefetch=0,
            grid=(n_bblk, n_mblk),
            in_specs=[in_spec, in_spec],
            out_specs=part_spec,
        ),
        compiler_params=pltpu.CompilerParams(
            dimension_semantics=("parallel", "parallel"),
            vmem_limit_bytes=_VMEM_LIMIT_BYTES,
        ),
    )(out_ncm, tgt_ncm)

    # Tiny epilogue on the fully accumulated per-class sums (24 scalars).
    sums = jnp.sum(parts, axis=(0, 1))[..., 0]          # (3, C)
    inter, psum, tsum = sums[0], sums[1], sums[2]
    dice = 1.0 - (2.0 * inter + SMOOTH) / (psum + tsum + SMOOTH)
    if class_weights is not None:
        dice = dice * jnp.asarray(class_weights, jnp.float32)
    # loss.mean() on a 0-d tensor is identity; the module divides by 9.
    return jnp.sum(dice) / 9.0


def _dice_loss_ref(output_nchw, target_nchw, class_weights=None):
    # Pure-JAX reference mirroring the PyTorch forward.
    p = jax.nn.softmax(output_nchw.astype(jnp.float32), axis=1)
    t = target_nchw.astype(jnp.float32)
    loss = 0.0
    for cc in range(NUM_CLASSES):
        iflat = p[:, cc].reshape(-1)
        tflat = t[:, cc].reshape(-1)
        inter = jnp.sum(iflat * tflat)
        term = 1.0 - (2.0 * inter + SMOOTH) / (
            jnp.sum(iflat) + jnp.sum(tflat) + SMOOTH)
        if class_weights is not None:
            term = class_weights[cc] * term
        loss = loss + term
    return loss / 9.0


if __name__ == "__main__":
    key0, key1 = jax.random.split(jax.random.PRNGKey(0))

    def make_inputs(key, n, h, w):
        k_logits, k_labels = jax.random.split(key)
        output = jax.random.normal(k_logits, (n, NUM_CLASSES, h, w), jnp.float32)
        labels = jax.random.randint(k_labels, (n, h, w), 0, NUM_CLASSES)
        target = jnp.transpose(
            jax.nn.one_hot(labels, NUM_CLASSES, dtype=jnp.float32), (0, 3, 1, 2))
        return output, target                       # both (N, C, H, W)

    # 1) 128-aligned spatial size (fast path, no padding / masking).
    out1, tgt1 = make_inputs(key0, 2, 16, 16)
    loss1 = jax.block_until_ready(dice_loss(out1, tgt1))
    ref1 = _dice_loss_ref(out1, tgt1)
    # approx=True EUP reciprocal carries ~1e-4 relative error; loss is O(1).
    assert jnp.allclose(loss1, ref1, rtol=1e-3, atol=1e-3), (loss1, ref1)

    # 2) Non-128-multiple spatial size (exercises pad + in-kernel mask path)
    #    with per-class weights.
    weights = [0.5, 1.0, 1.5, 2.0, 0.25, 0.75, 1.25, 1.75]
    out2, tgt2 = make_inputs(key1, 2, 10, 10)
    loss2 = jax.block_until_ready(dice_loss(out2, tgt2, class_weights=weights))
    ref2 = _dice_loss_ref(out2, tgt2, class_weights=weights)
    assert jnp.allclose(loss2, ref2, rtol=1e-3, atol=1e-3), (loss2, ref2)

    print("KERNEL_OK")
</pallas_src>

<mosaic_0001>
module attributes {stable_mosaic.version = 11 : i64} {
  func.func @kernel(%arg0: i32, %arg1: i32, %arg2: memref<2x8x256xf32, #tpu.memory_space<vmem>>, %arg3: memref<2x8x256xf32, #tpu.memory_space<vmem>>, %arg4: memref<1x1x3x8x1xf32, #tpu.memory_space<vmem>>) attributes {dimension_semantics = [#tpu.dimension_semantics<parallel>, #tpu.dimension_semantics<parallel>], iteration_bounds = array<i64: 1, 1>, scalar_prefetch = 0 : i64, scratch_operands = 0 : i64, tpu.core_type = #tpu.core_type<tc>, window_params = [{transform_indices = @transform_0, window_bounds = array<i64: 2, 8, 256>}, {transform_indices = @transform_1, window_bounds = array<i64: 2, 8, 256>}, {transform_indices = @transform_2, window_bounds = array<i64: 1, 1, 3, 8, 1>}]} {
    %c0 = arith.constant 0 : index
    %c0_0 = arith.constant 0 : index
    %c0_1 = arith.constant 0 : index
    %0 = vector.load %arg2[%c0, %c0_0, %c0_1] : memref<2x8x256xf32, #tpu.memory_space<vmem>>, vector<2x8x256xf32>
    %c0_2 = arith.constant 0 : index
    %c0_3 = arith.constant 0 : index
    %c0_4 = arith.constant 0 : index
    %1 = vector.load %arg3[%c0_2, %c0_3, %c0_4] : memref<2x8x256xf32, #tpu.memory_space<vmem>>, vector<2x8x256xf32>
    %cst = arith.constant dense<0xFF800000> : vector<2x256xf32>
    %2 = vector.multi_reduction <maximumf>, %0, %cst [1] : vector<2x8x256xf32> to vector<2x256xf32>
    %3 = vector.shape_cast %2 : vector<2x256xf32> to vector<2x1x256xf32>
    %4 = vector.broadcast %3 : vector<2x1x256xf32> to vector<2x8x256xf32>
    %5 = arith.subf %0, %4 : vector<2x8x256xf32>
    %6 = math.exp %5 : vector<2x8x256xf32>
    %cst_5 = arith.constant dense<0.000000e+00> : vector<2x256xf32>
    %7 = vector.multi_reduction <add>, %6, %cst_5 [1] : vector<2x8x256xf32> to vector<2x256xf32>
    %8 = vector.shape_cast %7 : vector<2x256xf32> to vector<2x1x256xf32>
    %9 = tpu.reciprocal %8 {approx = true} : vector<2x1x256xf32> -> vector<2x1x256xf32>
    %10 = vector.broadcast %9 : vector<2x1x256xf32> to vector<2x8x256xf32>
    %11 = arith.mulf %6, %10 : vector<2x8x256xf32>
    %12 = arith.mulf %11, %1 : vector<2x8x256xf32>
    %cst_6 = arith.constant dense<0.000000e+00> : vector<2x8xf32>
    %13 = vector.multi_reduction <add>, %12, %cst_6 [2] : vector<2x8x256xf32> to vector<2x8xf32>
    %14 = vector.shape_cast %13 : vector<2x8xf32> to vector<2x8x1xf32>
    %cst_7 = arith.constant dense<0.000000e+00> : vector<8x1xf32>
    %15 = vector.multi_reduction <add>, %14, %cst_7 [0] : vector<2x8x1xf32> to vector<8x1xf32>
    %c0_8 = arith.constant 0 : index
    %c0_9 = arith.constant 0 : index
    %c0_10 = arith.constant 0 : index
    %c0_11 = arith.constant 0 : index
    %c0_12 = arith.constant 0 : index
    %16 = vector.load %arg4[%c0_8, %c0_9, %c0_10, %c0_11, %c0_12] : memref<1x1x3x8x1xf32, #tpu.memory_space<vmem>>, vector<1x1x1x8x1xf32>
    %17 = vector.shape_cast %16 : vector<1x1x1x8x1xf32> to vector<8x1xf32>
    %18 = vector.shape_cast %15 : vector<8x1xf32> to vector<1x1x1x8x1xf32>
    tpu.vector_store %arg4[%c0_8, %c0_9, %c0_10, %c0_11, %c0_12], %18 {strides = array<i32>} : memref<1x1x3x8x1xf32, #tpu.memory_space<vmem>>, vector<1x1x1x8x1xf32>,
    %cst_13 = arith.constant dense<0.000000e+00> : vector<2x8xf32>
    %19 = vector.multi_reduction <add>, %11, %cst_13 [2] : vector<2x8x256xf32> to vector<2x8xf32>
    %20 = vector.shape_cast %19 : vector<2x8xf32> to vector<2x8x1xf32>
    %cst_14 = arith.constant dense<0.000000e+00> : vector<8x1xf32>
    %21 = vector.multi_reduction <add>, %20, %cst_14 [0] : vector<2x8x1xf32> to vector<8x1xf32>
    %c0_15 = arith.constant 0 : index
    %c0_16 = arith.constant 0 : index
    %c1 = arith.constant 1 : index
    %c0_17 = arith.constant 0 : index
    %c0_18 = arith.constant 0 : index
    %22 = vector.load %arg4[%c0_15, %c0_16, %c1, %c0_17, %c0_18] : memref<1x1x3x8x1xf32, #tpu.memory_space<vmem>>, vector<1x1x1x8x1xf32>
    %23 = vector.shape_cast %22 : vector<1x1x1x8x1xf32> to vector<8x1xf32>
    %24 = vector.shape_cast %21 : vector<8x1xf32> to vector<1x1x1x8x1xf32>
    tpu.vector_store %arg4[%c0_15, %c0_16, %c1, %c0_17, %c0_18], %24 {strides = array<i32>} : memref<1x1x3x8x1xf32, #tpu.memory_space<vmem>>, vector<1x1x1x8x1xf32>,
    %cst_19 = arith.constant dense<0.000000e+00> : vector<2x8xf32>
    %25 = vector.multi_reduction <add>, %1, %cst_19 [2] : vector<2x8x256xf32> to vector<2x8xf32>
    %26 = vector.shape_cast %25 : vector<2x8xf32> to vector<2x8x1xf32>
    %cst_20 = arith.constant dense<0.000000e+00> : vector<8x1xf32>
    %27 = vector.multi_reduction <add>, %26, %cst_20 [0] : vector<2x8x1xf32> to vector<8x1xf32>
    %c0_21 = arith.constant 0 : index
    %c0_22 = arith.constant 0 : index
    %c2 = arith.constant 2 : index
    %c0_23 = arith.constant 0 : index
    %c0_24 = arith.constant 0 : index
    %28 = vector.load %arg4[%c0_21, %c0_22, %c2, %c0_23, %c0_24] : memref<1x1x3x8x1xf32, #tpu.memory_space<vmem>>, vector<1x1x1x8x1xf32>
    %29 = vector.shape_cast %28 : vector<1x1x1x8x1xf32> to vector<8x1xf32>
    %30 = vector.shape_cast %27 : vector<8x1xf32> to vector<1x1x1x8x1xf32>
    tpu.vector_store %arg4[%c0_21, %c0_22, %c2, %c0_23, %c0_24], %30 {strides = array<i32>} : memref<1x1x3x8x1xf32, #tpu.memory_space<vmem>>, vector<1x1x1x8x1xf32>,
    return
  }
  func.func @transform_0(%arg0: i32, %arg1: i32) -> (i32, i32, i32) {
    %c0_i32 = arith.constant 0 : i32
    %c0_i32_0 = arith.constant 0 : i32
    return %arg0, %c0_i32, %arg1 : i32, i32, i32
  }
  func.func @transform_1(%arg0: i32, %arg1: i32) -> (i32, i32, i32) {
    %c0_i32 = arith.constant 0 : i32
    %c0_i32_0 = arith.constant 0 : i32
    return %arg0, %c0_i32, %arg1 : i32, i32, i32
  }
  func.func @transform_2(%arg0: i32, %arg1: i32) -> (i32, i32, i32, i32, i32) {
    %c0_i32 = arith.constant 0 : i32
    %c0_i32_0 = arith.constant 0 : i32
    %c0_i32_1 = arith.constant 0 : i32
    %c0_i32_2 = arith.constant 0 : i32
    return %arg0, %arg1, %c0_i32, %c0_i32_0, %c0_i32_1 : i32, i32, i32, i32, i32
  }
}

</mosaic_0001>

<llo_original>
// kernel: tpu_custom_call.1
$region0: #{tpu_custom_call.1}
  #allocation0 [shape = 'u32[]', space=smem, size = 0x4, offset = 0x4, fixed_abs, tag = 'smem constant byte address 0x4 - core index']
  #allocation1 [shape = 'u32[144,128]{1,0:T(1,128)}', space=vmem, size = 0x12000, scoped, tag = 'internal scratch']
  %s0 = inlined_call_operand.hbm [shape: f32[2,8,256], index: 0, kind: input, shape index: {}]
  %s1 = inlined_call_operand.hbm [shape: f32[2,8,256], index: 1, kind: input, shape index: {}]
  %s2 = inlined_call_operand.vmem [shape: f32[1,1,3,8,1], index: 2, kind: output, shape index: {}]
  %s3 = sld [smem:[#allocation0]]
  $region26: #{tpu_custom_call.1} parent=0
    _
  %s5 = ssub.s32 1, %s3
  %s6 = scalar_select 0, %s5, %s3
  $region1: #{tpu_custom_call.1} parent=0
    #allocation2 [shape = 'u8[16384]{0}', space=vmem, size = 0x4000, scoped, tag = 'input window, operand 0, single buffered']
    #allocation3 [shape = 's32[1]{0}', space=sflag, size = 0x4, scoped, tag = 'scoped memory for tpu_custom_call.1']
    #allocation4 [shape = 'u8[16384]{0}', space=vmem, size = 0x4000, scoped, tag = 'input window, operand 1, single buffered']
    #allocation5 [shape = 's32[1]{0}', space=sflag, size = 0x4, scoped, tag = 'scoped memory for tpu_custom_call.1']
    %7 = vsyncpa [#allocation3], 0
    %8 = vsyncpa [#allocation5], 0
    // Predicated region
    $region2: #{tpu_custom_call.1} parent=1 // pred_check
      _
    $region3: #{tpu_custom_call.1} parent=1 // pred_check_branch
      %10 = sbr.rel (0) target = $region5
    $region4: #{tpu_custom_call.1} parent=1 // pred_region
      %s12 = ssub.s32 512, 512
      %13 = vsyncadd [#allocation3], %s12
      %s14 = sshll.u32 [#allocation2], 4
      %s15 = int_to_ptr.vmem [resolvable:$true] %s14
      %20 = dma.hbm_to_vmem [thread:$0]  %s0, 512, %s15, [#allocation3], 256, 256, 16
    $region5: #{tpu_custom_call.1} parent=1 // pred_fallthru
      _
    // Predicated region
    $region6: #{tpu_custom_call.1} parent=1 // pred_check
      _
    $region7: #{tpu_custom_call.1} parent=1 // pred_check_branch
      %22 = sbr.rel (0) target = $region9
    $region8: #{tpu_custom_call.1} parent=1 // pred_region
      %s24 = ssub.s32 512, 512
      %25 = vsyncadd [#allocation5], %s24
      %s26 = sshll.u32 [#allocation4], 4
      %s27 = int_to_ptr.vmem [resolvable:$true] %s26
      %32 = dma.hbm_to_vmem [thread:$0]  %s1, 512, %s27, [#allocation5], 256, 256, 16
    $region9: #{tpu_custom_call.1} parent=1 // pred_fallthru
      _
    // Predicated region
    $region10: #{tpu_custom_call.1} parent=1 // pred_check
      _
    $region11: #{tpu_custom_call.1} parent=1 // pred_check_branch
      %34 = sbr.rel (0) target = $region13
    $region12: #{tpu_custom_call.1} parent=1 // pred_region
      %35 = dma.done [#allocation3], 512
    $region13: #{tpu_custom_call.1} parent=1 // pred_fallthru
      _
    // Predicated region
    $region14: #{tpu_custom_call.1} parent=1 // pred_check
      _
    $region15: #{tpu_custom_call.1} parent=1 // pred_check_branch
      %37 = sbr.rel (0) target = $region17
    $region16: #{tpu_custom_call.1} parent=1 // pred_region
      %38 = dma.done [#allocation5], 512
    $region17: #{tpu_custom_call.1} parent=1 // pred_fallthru
      _
    %v39 = vld [vmem:[#allocation2] sm:$0xff]
    %v40 = vld [vmem:[#allocation2 + $0x8] sm:$0xff]
    %v41 = vld [vmem:[#allocation2 + $0x10] sm:$0xff]
    %v42 = vld [vmem:[#allocation2 + $0x18] sm:$0xff]
    %v43 = vld [vmem:[#allocation4] sm:$0xff]
    %v44 = vld [vmem:[#allocation4 + $0x8] sm:$0xff]
    %v45 = vld [vmem:[#allocation4 + $0x10] sm:$0xff]
    %v46 = vld [vmem:[#allocation4 + $0x18] sm:$0xff]
    %v47 = vrot.slane %v39, 4
    %v48 = vmax.f32 %v39, %v47
    %v49 = vrot.slane %v48, 2
    %v50 = vmax.f32 %v48, %v49
    %v51 = vrot.slane %v50, 1
    %v52 = vmax.f32 %v50, %v51
    %v53 = vrot.slane %v40, 4
    %v54 = vmax.f32 %v40, %v53
    %v55 = vrot.slane %v54, 2
    %v56 = vmax.f32 %v54, %v55
    %v57 = vrot.slane %v56, 1
    %v58 = vmax.f32 %v56, %v57
    %v59 = vrot.slane %v41, 4
    %v60 = vmax.f32 %v41, %v59
    %v61 = vrot.slane %v60, 2
    %v62 = vmax.f32 %v60, %v61
    %v63 = vrot.slane %v62, 1
    %v64 = vmax.f32 %v62, %v63
    %v65 = vrot.slane %v42, 4
    %v66 = vmax.f32 %v42, %v65
    %v67 = vrot.slane %v66, 2
    %v68 = vmax.f32 %v66, %v67
    %v69 = vrot.slane %v68, 1
    %v70 = vmax.f32 %v68, %v69
    %v71 = vsub.f32 %v39, %v52
    %v72 = vsub.f32 %v40, %v58
    %v73 = vsub.f32 %v41, %v64
    %v74 = vsub.f32 %v42, %v70
    %v75 = vmul.f32 %v71, 1.442695
    %v76 = vpow.pop %v75
    %v77 = vmul.f32 %v72, 1.442695
    %v78 = vpow.pop %v77
    %v79 = vmul.f32 %v73, 1.442695
    %v80 = vpow.pop %v79
    %v81 = vmul.f32 %v74, 1.442695
    %v82 = vpow.pop %v81
    %v83 = vrot.slane %v76, 4
    %v84 = vadd.f32 %v76, %v83
    %v85 = vrot.slane %v84, 2
    %v86 = vadd.f32 %v84, %v85
    %v87 = vrot.slane %v86, 1
    %v88 = vadd.f32 %v86, %v87
    %v89 = vrot.slane %v78, 4
    %v90 = vadd.f32 %v78, %v89
    %v91 = vrot.slane %v90, 2
    %v92 = vadd.f32 %v90, %v91
    %v93 = vrot.slane %v92, 1
    %v94 = vadd.f32 %v92, %v93
    %v95 = vrot.slane %v80, 4
    %v96 = vadd.f32 %v80, %v95
    %v97 = vrot.slane %v96, 2
    %v98 = vadd.f32 %v96, %v97
    %v99 = vrot.slane %v98, 1
    %v100 = vadd.f32 %v98, %v99
    %v101 = vrot.slane %v82, 4
    %v102 = vadd.f32 %v82, %v101
    %v103 = vrot.slane %v102, 2
    %v104 = vadd.f32 %v102, %v103
    %v105 = vrot.slane %v104, 1
    %v106 = vadd.f32 %v104, %v105
    %v107 = vrcp.pop %v88
    %v108 = vrcp.pop %v94
    %v109 = vrcp.pop %v100
    %v110 = vrcp.pop %v106
    %v111 = vmul.f32 %v76, %v107
    %v112 = vmul.f32 %v78, %v108
    %v113 = vmul.f32 %v80, %v109
    %v114 = vmul.f32 %v82, %v110
    %v115 = vmul.f32 %v111, %v43
    %v116 = vmul.f32 %v112, %v44
    %v117 = vmul.f32 %v113, %v45
    %v118 = vmul.f32 %v114, %v46
    %v119 = vadd.f32 %v115, %v116
    %120 = vadd.xlane.f32.xlu0 %v119
    %v121 = vpop.xlane.xlu0 %120
    %v122 = vadd.f32 %v117, %v118
    %123 = vadd.xlane.f32.xlu0 %v122
    %v124 = vpop.xlane.xlu0 %123
    %v125 = vadd.f32 %v121, %v124
    %vm126 = vcmask 7168
    %127 = vst.msk [vmem:[%s2] sm:$0xff] %vm126, %v125
    %v128 = vadd.f32 %v111, %v112
    %129 = vadd.xlane.f32.xlu0 %v128
    %v130 = vpop.xlane.xlu0 %129
    %v131 = vadd.f32 %v113, %v114
    %132 = vadd.xlane.f32.xlu0 %v131
    %v133 = vpop.xlane.xlu0 %132
    %v134 = vadd.f32 %v130, %v133
    %s135 = scalar_lea.vmem %s2, 8
    %136 = vst.msk [vmem:[%s135] sm:$0xff] %vm126, %v134
    %v137 = vadd.f32 %v43, %v44
    %138 = vadd.xlane.f32.xlu0 %v137
    %v139 = vpop.xlane.xlu0 %138
    %v140 = vadd.f32 %v45, %v46
    %141 = vadd.xlane.f32.xlu0 %v140
    %v142 = vpop.xlane.xlu0 %141
    %v143 = vadd.f32 %v139, %v142
    %s144 = scalar_lea.vmem %s2, 16
    %145 = vst.msk [vmem:[%s144] sm:$0xff] %vm126, %v143
    // Predicated region
    $region18: #{tpu_custom_call.1} parent=1 // pred_check
      _
    $region19: #{tpu_custom_call.1} parent=1 // pred_check_branch
      %147 = sbr.rel (0) target = $region21
    $region20: #{tpu_custom_call.1} parent=1 // pred_region
      _
    $region21: #{tpu_custom_call.1} parent=1 // pred_fallthru
      _
    // Predicated region
    $region22: #{tpu_custom_call.1} parent=1 // pred_check
      _
    $region23: #{tpu_custom_call.1} parent=1 // pred_check_branch
      %149 = sbr.rel (0) target = $region25
    $region24: #{tpu_custom_call.1} parent=1 // pred_region
      _
    $region25: #{tpu_custom_call.1} parent=1 // pred_fallthru
      _
    %150 = vsyncpa [#allocation3], 1
    %151 = vsyncpa [#allocation5], 1

</llo_original>
